<compile_context>
chip_gen: v5e
topology: v5e:2x2
jax: 0.10.0
libtpu: 0.0.40
codegen_flags: <defaults>
</compile_context>

<pallas_src>
import functools

import jax
import jax.numpy as jnp
from jax.experimental import pallas as pl

LANE = 128


# ----------------------------------------------------------------------------
# Fused Pallas kernel: (encoder folded into layer 0) + hidden layers + output.
# ----------------------------------------------------------------------------
def _fused_gcn_forward_kernel(adj_ref, x_ref, w0_ref, w_stack_ref, b_stack_ref,
                              o_ref, *, num_layers):
    adj = adj_ref[...]                              # bf16, loaded once
    x = x_ref[...].astype(jnp.bfloat16)

    # Layer 0 (feat_encode folded in):
    #   h = relu( A @ (x @ W_fused + b_pre) + b_0 )
    hw = jnp.dot(x, w0_ref[...], preferred_element_type=jnp.float32)
    hw = hw + b_stack_ref[0]                        # pre-aggregation bias
    h = jnp.maximum(
        jnp.dot(adj, hw.astype(jnp.bfloat16), preferred_element_type=jnp.float32)
        + b_stack_ref[1],
        0.0,
    )

    # Hidden layers 1 .. num_layers-1:  h = relu(A @ (h @ W_l) + b_l)
    for l in range(1, num_layers):
        hw = jnp.dot(h.astype(jnp.bfloat16), w_stack_ref[l - 1],
                     preferred_element_type=jnp.float32)
        h = jnp.maximum(
            jnp.dot(adj, hw.astype(jnp.bfloat16),
                    preferred_element_type=jnp.float32)
            + b_stack_ref[l + 1],
            0.0,
        )

    # Output GraphConv (no activation)
    hw = jnp.dot(h.astype(jnp.bfloat16), w_stack_ref[num_layers - 1],
                 preferred_element_type=jnp.float32)
    o_ref[...] = (
        jnp.dot(adj, hw.astype(jnp.bfloat16), preferred_element_type=jnp.float32)
        + b_stack_ref[num_layers + 1]
    ).astype(o_ref.dtype)


# ----------------------------------------------------------------------------
# One-time parameter preparation (pad / fold / stack / bf16-cast).
# ----------------------------------------------------------------------------
def _pad2d(a, rows, cols):
    return jnp.pad(a, ((0, rows - a.shape[0]), (0, cols - a.shape[1])))


def _round_up(x, m):
    return ((x + m - 1) // m) * m


def prepare_model(params, adj):
    """Fold encoder into layer 0, zero-pad lanes to 128, stack weights/biases,
    and pre-cast MXU operands to bf16.  Call ONCE at model init."""
    num_layers = len(params["layers"])
    in_dim, num_hidden = params["w_enc"].shape
    num_classes = params["w_out"].shape[1]
    dim_p = _round_up(max(num_hidden, num_classes), LANE)

    w_hid0, b_hid0 = params["layers"][0]
    # Encoder fold (exact: no nonlinearity / dropout between encode and conv0).
    w_fused = params["w_enc"] @ w_hid0              # (in_dim, hidden)
    b_pre = params["b_enc"] @ w_hid0                # (1, hidden), pre-aggregation

    w0 = _pad2d(w_fused, in_dim, dim_p).astype(jnp.bfloat16)

    rest_ws = [w for (w, _) in params["layers"][1:]] + [params["w_out"]]
    w_stack = jnp.stack(
        [_pad2d(w, dim_p, dim_p) for w in rest_ws]
    ).astype(jnp.bfloat16)                          # (num_layers, dim_p, dim_p)

    post_bs = [b for (_, b) in params["layers"]] + [params["b_out"]]
    b_stack = jnp.stack(
        [_pad2d(b_pre, 1, dim_p)] + [_pad2d(b, 1, dim_p) for b in post_bs]
    ).astype(jnp.float32)                           # (num_layers+2, 1, dim_p)

    return {
        "adj": adj.astype(jnp.bfloat16),            # graph is fixed at init
        "w0": w0,
        "w_stack": w_stack,
        "b_stack": b_stack,
        "num_classes": int(num_classes),            # Python int (static)
    }


# ----------------------------------------------------------------------------
# Per-call forward: single fused pallas_call, whole-array blocks, slice out.
# ----------------------------------------------------------------------------
def _full_spec(a):
    return pl.BlockSpec(a.shape, lambda: (0,) * a.ndim)


@functools.partial(jax.jit, static_argnums=(5,))
def _forward_jit(adj, x, w0, w_stack, b_stack, num_classes):
    n = x.shape[0]
    num_layers = w_stack.shape[0]
    dim_p = w_stack.shape[-1]

    inputs = [adj, x, w0, w_stack, b_stack]
    kernel = functools.partial(_fused_gcn_forward_kernel, num_layers=num_layers)
    logits_padded = pl.pallas_call(
        kernel,
        out_shape=jax.ShapeDtypeStruct((n, dim_p), jnp.float32),
        in_specs=[_full_spec(a) for a in inputs],
        out_specs=pl.BlockSpec((n, dim_p), lambda: (0, 0)),
    )(*inputs)
    return logits_padded[:, :num_classes]


def graph_model_forward(prepped, x_list, e_feat=None):
    """Equivalent of GraphModel.forward for model_name == 'GCN' (e_feat unused)."""
    # TODO(synk): other GraphModel branches (MLP/GAT/RGCN/HAN/HGT/SHGN/H2GCN/
    # LINKX) depend on DGL sub-modules not provided in the reference; only the
    # GCN path is built.
    return _forward_jit(prepped["adj"], x_list[0], prepped["w0"],
                        prepped["w_stack"], prepped["b_stack"],
                        prepped["num_classes"])


# ----------------------------------------------------------------------------
# Model: parameter construction + deterministic synthetic graph.
# ----------------------------------------------------------------------------
def make_params(key, in_dim, num_hidden, num_classes, num_layers):
    """Deterministic (seeded) parameter init matching the GCN shapes."""
    params = {}
    keys = jax.random.split(key, 2 + 2 * (num_layers + 1))
    ki = iter(keys)

    def glorot(k, shape):
        fan_in, fan_out = shape
        scale = jnp.sqrt(6.0 / (fan_in + fan_out))
        return jax.random.uniform(k, shape, jnp.float32, -scale, scale)

    # feat_encode: fc_list[0]  (single node type)
    params["w_enc"] = glorot(next(ki), (in_dim, num_hidden))
    params["b_enc"] = jnp.zeros((1, num_hidden), jnp.float32)

    # hidden GraphConv layers
    params["layers"] = []
    for _ in range(num_layers):
        w = glorot(next(ki), (num_hidden, num_hidden))
        b = jnp.zeros((1, num_hidden), jnp.float32)
        params["layers"].append((w, b))
        next(ki)  # keep key consumption deterministic/padded

    # output GraphConv
    params["w_out"] = glorot(next(ki), (num_hidden, num_classes))
    params["b_out"] = jnp.zeros((1, num_classes), jnp.float32)
    return params


def normalized_adjacency(num_nodes):
    """Deterministic ring graph + self loops, symmetric normalization."""
    idx = jnp.arange(num_nodes)
    a = jnp.zeros((num_nodes, num_nodes), jnp.float32)
    a = a.at[idx, (idx + 1) % num_nodes].set(1.0)
    a = a.at[(idx + 1) % num_nodes, idx].set(1.0)
    a = a + jnp.eye(num_nodes, dtype=jnp.float32)  # self loops
    deg = a.sum(axis=1)
    d_inv_sqrt = 1.0 / jnp.sqrt(deg)
    return a * d_inv_sqrt[:, None] * d_inv_sqrt[None, :]


# ----------------------------------------------------------------------------
# Main
# ----------------------------------------------------------------------------
if __name__ == "__main__":
    N = 32            # number of graph nodes
    IN_DIM = 16       # in_dims[0]
    NUM_HIDDEN = 32
    NUM_CLASSES = 8
    NUM_LAYERS = 2

    key = jax.random.PRNGKey(0)
    k_feat, k_params = jax.random.split(key)

    x = jax.random.normal(k_feat, (N, IN_DIM), jnp.float32)
    x_list = [x]
    adj = normalized_adjacency(N)
    params = make_params(k_params, IN_DIM, NUM_HIDDEN, NUM_CLASSES, NUM_LAYERS)

    # One-time prep (fold encoder, pad, stack, bf16-cast) — NOT in the call path.
    prepped = prepare_model(params, adj)

    logits = graph_model_forward(prepped, x_list)
    logits = jax.block_until_ready(logits)

    assert logits.shape == (N, NUM_CLASSES)
    assert bool(jnp.all(jnp.isfinite(logits)))
    print("KERNEL_OK")
</pallas_src>

<mosaic_0001>
module attributes {stable_mosaic.version = 11 : i64} {
  func.func @_fused_gcn_forward_kernel(%arg0: memref<32x32xbf16, #tpu.memory_space<vmem>>, %arg1: memref<32x16xf32, #tpu.memory_space<vmem>>, %arg2: memref<16x128xbf16, #tpu.memory_space<vmem>>, %arg3: memref<2x128x128xbf16, #tpu.memory_space<vmem>>, %arg4: memref<4x1x128xf32, #tpu.memory_space<vmem>>, %arg5: memref<32x128xf32, #tpu.memory_space<vmem>>) attributes {dimension_semantics = [], scalar_prefetch = 0 : i64, scratch_operands = 0 : i64, tpu.core_type = #tpu.core_type<tc>} {
    %c0 = arith.constant 0 : index
    %c0_0 = arith.constant 0 : index
    %0 = vector.load %arg0[%c0, %c0_0] : memref<32x32xbf16, #tpu.memory_space<vmem>>, vector<32x32xbf16>
    %c0_1 = arith.constant 0 : index
    %c0_2 = arith.constant 0 : index
    %1 = vector.load %arg1[%c0_1, %c0_2] : memref<32x16xf32, #tpu.memory_space<vmem>>, vector<32x16xf32>
    %2 = arith.truncf %1 : vector<32x16xf32> to vector<32x16xbf16>
    %c0_3 = arith.constant 0 : index
    %c0_4 = arith.constant 0 : index
    %3 = vector.load %arg2[%c0_3, %c0_4] : memref<16x128xbf16, #tpu.memory_space<vmem>>, vector<16x128xbf16>
    %cst = arith.constant dense<0.000000e+00> : vector<32x128xf32>
    %4 = tpu.matmul %2, %3, %cst {dimension_numbers = #tpu.dot_dimension_numbers<[1], [0], [0], [1], [0, 0, 1, 1], [], []>} : vector<32x16xbf16>, vector<16x128xbf16>, vector<32x128xf32> -> vector<32x128xf32>
    %c0_5 = arith.constant 0 : index
    %c0_6 = arith.constant 0 : index
    %c0_7 = arith.constant 0 : index
    %5 = vector.load %arg4[%c0_5, %c0_6, %c0_7] : memref<4x1x128xf32, #tpu.memory_space<vmem>>, vector<1x1x128xf32>
    %6 = vector.shape_cast %5 : vector<1x1x128xf32> to vector<1x128xf32>
    %7 = vector.broadcast %6 : vector<1x128xf32> to vector<32x128xf32>
    %8 = arith.addf %4, %7 : vector<32x128xf32>
    %9 = arith.truncf %8 : vector<32x128xf32> to vector<32x128xbf16>
    %cst_8 = arith.constant dense<0.000000e+00> : vector<32x128xf32>
    %10 = tpu.matmul %0, %9, %cst_8 {dimension_numbers = #tpu.dot_dimension_numbers<[1], [0], [0], [1], [0, 0, 1, 1], [], []>} : vector<32x32xbf16>, vector<32x128xbf16>, vector<32x128xf32> -> vector<32x128xf32>
    %c1 = arith.constant 1 : index
    %c0_9 = arith.constant 0 : index
    %c0_10 = arith.constant 0 : index
    %11 = vector.load %arg4[%c1, %c0_9, %c0_10] : memref<4x1x128xf32, #tpu.memory_space<vmem>>, vector<1x1x128xf32>
    %12 = vector.shape_cast %11 : vector<1x1x128xf32> to vector<1x128xf32>
    %13 = vector.broadcast %12 : vector<1x128xf32> to vector<32x128xf32>
    %14 = arith.addf %10, %13 : vector<32x128xf32>
    %cst_11 = arith.constant 0.000000e+00 : f32
    %15 = vector.broadcast %cst_11 : f32 to vector<32x128xf32>
    %16 = arith.maximumf %14, %15 : vector<32x128xf32>
    %17 = arith.truncf %16 : vector<32x128xf32> to vector<32x128xbf16>
    %c0_12 = arith.constant 0 : index
    %c0_13 = arith.constant 0 : index
    %c0_14 = arith.constant 0 : index
    %18 = vector.load %arg3[%c0_12, %c0_13, %c0_14] : memref<2x128x128xbf16, #tpu.memory_space<vmem>>, vector<1x128x128xbf16>
    %19 = vector.shape_cast %18 : vector<1x128x128xbf16> to vector<128x128xbf16>
    %cst_15 = arith.constant dense<0.000000e+00> : vector<32x128xf32>
    %20 = tpu.matmul %17, %19, %cst_15 {dimension_numbers = #tpu.dot_dimension_numbers<[1], [0], [0], [1], [0, 0, 1, 1], [], []>} : vector<32x128xbf16>, vector<128x128xbf16>, vector<32x128xf32> -> vector<32x128xf32>
    %21 = arith.truncf %20 : vector<32x128xf32> to vector<32x128xbf16>
    %cst_16 = arith.constant dense<0.000000e+00> : vector<32x128xf32>
    %22 = tpu.matmul %0, %21, %cst_16 {dimension_numbers = #tpu.dot_dimension_numbers<[1], [0], [0], [1], [0, 0, 1, 1], [], []>} : vector<32x32xbf16>, vector<32x128xbf16>, vector<32x128xf32> -> vector<32x128xf32>
    %c2 = arith.constant 2 : index
    %c0_17 = arith.constant 0 : index
    %c0_18 = arith.constant 0 : index
    %23 = vector.load %arg4[%c2, %c0_17, %c0_18] : memref<4x1x128xf32, #tpu.memory_space<vmem>>, vector<1x1x128xf32>
    %24 = vector.shape_cast %23 : vector<1x1x128xf32> to vector<1x128xf32>
    %25 = vector.broadcast %24 : vector<1x128xf32> to vector<32x128xf32>
    %26 = arith.addf %22, %25 : vector<32x128xf32>
    %cst_19 = arith.constant 0.000000e+00 : f32
    %27 = vector.broadcast %cst_19 : f32 to vector<32x128xf32>
    %28 = arith.maximumf %26, %27 : vector<32x128xf32>
    %29 = arith.truncf %28 : vector<32x128xf32> to vector<32x128xbf16>
    %c1_20 = arith.constant 1 : index
    %c0_21 = arith.constant 0 : index
    %c0_22 = arith.constant 0 : index
    %30 = vector.load %arg3[%c1_20, %c0_21, %c0_22] : memref<2x128x128xbf16, #tpu.memory_space<vmem>>, vector<1x128x128xbf16>
    %31 = vector.shape_cast %30 : vector<1x128x128xbf16> to vector<128x128xbf16>
    %cst_23 = arith.constant dense<0.000000e+00> : vector<32x128xf32>
    %32 = tpu.matmul %29, %31, %cst_23 {dimension_numbers = #tpu.dot_dimension_numbers<[1], [0], [0], [1], [0, 0, 1, 1], [], []>} : vector<32x128xbf16>, vector<128x128xbf16>, vector<32x128xf32> -> vector<32x128xf32>
    %33 = arith.truncf %32 : vector<32x128xf32> to vector<32x128xbf16>
    %cst_24 = arith.constant dense<0.000000e+00> : vector<32x128xf32>
    %34 = tpu.matmul %0, %33, %cst_24 {dimension_numbers = #tpu.dot_dimension_numbers<[1], [0], [0], [1], [0, 0, 1, 1], [], []>} : vector<32x32xbf16>, vector<32x128xbf16>, vector<32x128xf32> -> vector<32x128xf32>
    %c3 = arith.constant 3 : index
    %c0_25 = arith.constant 0 : index
    %c0_26 = arith.constant 0 : index
    %35 = vector.load %arg4[%c3, %c0_25, %c0_26] : memref<4x1x128xf32, #tpu.memory_space<vmem>>, vector<1x1x128xf32>
    %36 = vector.shape_cast %35 : vector<1x1x128xf32> to vector<1x128xf32>
    %37 = vector.broadcast %36 : vector<1x128xf32> to vector<32x128xf32>
    %38 = arith.addf %34, %37 : vector<32x128xf32>
    %c0_27 = arith.constant 0 : index
    %c0_28 = arith.constant 0 : index
    %39 = vector.load %arg5[%c0_27, %c0_28] : memref<32x128xf32, #tpu.memory_space<vmem>>, vector<32x128xf32>
    tpu.vector_store %arg5[%c0_27, %c0_28], %38 {strides = array<i32>} : memref<32x128xf32, #tpu.memory_space<vmem>>, vector<32x128xf32>,
    return
  }
}

</mosaic_0001>

<llo_original>
// kernel: _forward_jit.1
$region0: #{_forward_jit.1}
  #allocation0 [shape = 'u32[]', space=smem, size = 0x4, offset = 0x4, fixed_abs, tag = 'smem constant byte address 0x4 - core index']
  #allocation1 [shape = 'u32[72,128]{1,0:T(1,128)}', space=vmem, size = 0x9000, scoped, tag = 'internal scratch']
  %s0 = inlined_call_operand.vmem [shape: bf16[32,32], index: 0, kind: input, shape index: {}]
  %s1 = inlined_call_operand.vmem [shape: f32[32,16], index: 1, kind: input, shape index: {}]
  %s2 = inlined_call_operand.vmem [shape: bf16[16,128], index: 2, kind: input, shape index: {}]
  %s3 = inlined_call_operand.hbm [shape: bf16[2,128,128], index: 3, kind: input, shape index: {}]
  %s4 = inlined_call_operand.vmem [shape: f32[4,1,128], index: 4, kind: input, shape index: {}]
  %s5 = inlined_call_operand.vmem [shape: f32[32,128], index: 5, kind: output, shape index: {}]
  %s6 = sld [smem:[#allocation0]]
  $region34: #{_forward_jit.1} parent=0
    _
  %s8 = ssub.s32 1, %s6
  %s9 = scalar_select 0, %s8, %s6
  $region1: #{_forward_jit.1} parent=0
    #allocation2 [shape = 'u8[65536]{0}', space=vmem, size = 0x10000, scoped, tag = 'input window, operand 3, single buffered']
    #allocation3 [shape = 's32[1]{0}', space=sflag, size = 0x4, scoped, tag = 'scoped memory for _forward_jit.1']
    %10 = vsyncpa [#allocation3], 0
    // Predicated region
    $region2: #{_forward_jit.1} parent=1 // pred_check
      _
    $region3: #{_forward_jit.1} parent=1 // pred_check_branch
      %12 = sbr.rel (0) target = $region5
    $region4: #{_forward_jit.1} parent=1 // pred_region
      _
    $region5: #{_forward_jit.1} parent=1 // pred_fallthru
      _
    // Predicated region
    $region6: #{_forward_jit.1} parent=1 // pred_check
      _
    $region7: #{_forward_jit.1} parent=1 // pred_check_branch
      %14 = sbr.rel (0) target = $region9
    $region8: #{_forward_jit.1} parent=1 // pred_region
      _
    $region9: #{_forward_jit.1} parent=1 // pred_fallthru
      _
    // Predicated region
    $region10: #{_forward_jit.1} parent=1 // pred_check
      _
    $region11: #{_forward_jit.1} parent=1 // pred_check_branch
      %16 = sbr.rel (0) target = $region13
    $region12: #{_forward_jit.1} parent=1 // pred_region
      _
    $region13: #{_forward_jit.1} parent=1 // pred_fallthru
      _
    // Predicated region
    $region14: #{_forward_jit.1} parent=1 // pred_check
      _
    $region15: #{_forward_jit.1} parent=1 // pred_check_branch
      %18 = sbr.rel (0) target = $region17
    $region16: #{_forward_jit.1} parent=1 // pred_region
      %20 = vsyncadd [#allocation3], 0
      %s21 = sshll.u32 %s3, 4
      %s22 = int_to_ptr.hbm [resolvable:$true] %s21
      %s23 = sshll.u32 [#allocation2], 4
      %s24 = int_to_ptr.vmem [resolvable:$true] %s23
      %29 = dma.hbm_to_vmem [thread:$0]  %s22, 2048, %s24, [#allocation3], 64, 64, 4
    $region17: #{_forward_jit.1} parent=1 // pred_fallthru
      _
    // Predicated region
    $region18: #{_forward_jit.1} parent=1 // pred_check
      _
    $region19: #{_forward_jit.1} parent=1 // pred_check_branch
      %31 = sbr.rel (0) target = $region21
    $region20: #{_forward_jit.1} parent=1 // pred_region
      _
    $region21: #{_forward_jit.1} parent=1 // pred_fallthru
      _
    // Predicated region
    $region22: #{_forward_jit.1} parent=1 // pred_check
      _
    $region23: #{_forward_jit.1} parent=1 // pred_check_branch
      %33 = sbr.rel (0) target = $region25
    $region24: #{_forward_jit.1} parent=1 // pred_region
      %35 = dma.done [#allocation3], 2048
    $region25: #{_forward_jit.1} parent=1 // pred_fallthru
      _
    %v37 = vld [vmem:[%s0] sm:$0xf]
    %v38 = vld [vmem:[%s0 + $0x4] sm:$0xf]
    %v39 = vld [vmem:[%s0 + $0x8] sm:$0xf]
    %v40 = vld [vmem:[%s0 + $0xc] sm:$0xf]
    %v41 = vld [vmem:[%s1] sm:$0xff]
    %v42 = vld [vmem:[%s1 + $0x8] sm:$0xff]
    %v43 = vld [vmem:[%s1 + $0x10] sm:$0xff]
    %v44 = vld [vmem:[%s1 + $0x18] sm:$0xff]
    %v45 = vpack.c.bf16 %v42, %v41
    %v46 = vpack.c.bf16 %v44, %v43
    %v47 = vld [vmem:[%s2] sm:$0xf]
    %v48 = vld [vmem:[%s2 + $0x4] sm:$0xf]
    %v49 = vld [vmem:[%s4] sm:$0x1]
    %v51 = vperm.slane %v49, 0
    %v55 = vunpack.c.l.b16 %v47
    %v56 = vunpack.c.l.b16 %v48
    %v57 = vpack.c.b16 %v56, %v55
    %vm59 = vcmask 130048
    %v61 = vsel %vm59, %v45, 0
    %v64 = vsel %vm59, %v46, 0
    %66 = vmatpush.bf16.msra.mxu0 0
    %67 = vmatpush.bf16.msra.mxu0 0
    %68 = vmatpush.bf16.msra.mxu0 0
    %69 = vmatpush.bf16.msra.mxu0 0
    %70 = vmatpush.bf16.msra.mxu0 0
    %71 = vmatpush.bf16.msra.mxu0 0
    %72 = vmatpush.bf16.msra.mxu0 0
    %73 = vmatpush.bf16.msra.mxu0 %v57
    %74 = vmatmul.bf16.gmra.mxu0 %v61
    %v75 = vpop.f32.mrf.mxu0
    %v76 = vadd.f32 %v51, %v75
    %v77 = vpop.f32.mrf.mxu0
    %v78 = vadd.f32 %v51, %v77
    %79 = vmatmul.bf16.gmra.mxu0 %v64
    %v80 = vpop.f32.mrf.mxu0
    %v81 = vadd.f32 %v51, %v80
    %v82 = vpop.f32.mrf.mxu0
    %v83 = vadd.f32 %v51, %v82
    %84 = vdwg.mxu0
    %v85 = vpack.c.bf16 %v78, %v76
    %v86 = vpack.c.bf16 %v83, %v81
    %s87 = scalar_lea.vmem %s4, 1
    %v88 = vld [vmem:[%s87] sm:$0x1]
    %v90 = vperm.slane %v88, 0
    %v96 = vunpack.c.l.b16 %v37
    %v97 = vunpack.c.l.b16 %v38
    %v98 = vunpack.c.l.b16 %v39
    %v99 = vunpack.c.l.b16 %v40
    %v100 = vpack.c.b16 %v97, %v96
    %v101 = vpack.c.b16 %v99, %v98
    %vm102 = vcmask 261120
    %v104 = vsel %vm102, %v100, 0
    %v107 = vsel %vm102, %v101, 0
    %109 = vmatpush.bf16.msra.mxu0 0
    %110 = vmatpush.bf16.msra.mxu0 0
    %111 = vmatpush.bf16.msra.mxu0 0
    %112 = vmatpush.bf16.msra.mxu0 0
    %113 = vmatpush.bf16.msra.mxu0 0
    %114 = vmatpush.bf16.msra.mxu0 0
    %115 = vmatpush.bf16.msra.mxu0 %v86
    %116 = vmatpush.bf16.msra.mxu0 %v85
    %117 = vmatmul.bf16.gmra.mxu0 %v104
    %v118 = vpop.f32.mrf.mxu0
    %v119 = vadd.f32 %v90, %v118
    %v120 = vpop.f32.mrf.mxu0
    %v121 = vadd.f32 %v90, %v120
    %122 = vmatmul.bf16.gmra.mxu0 %v107
    %v123 = vpop.f32.mrf.mxu0
    %v124 = vadd.f32 %v90, %v123
    %v125 = vpop.f32.mrf.mxu0
    %v126 = vadd.f32 %v90, %v125
    %127 = vdwg.mxu0
    %v128 = vmax.f32 %v119, 0.0
    %v129 = vmax.f32 %v121, 0.0
    %v130 = vmax.f32 %v124, 0.0
    %v131 = vmax.f32 %v126, 0.0
    %v132 = vpack.c.bf16 %v129, %v128
    %v133 = vpack.c.bf16 %v131, %v130
    %v134 = vld [vmem:[#allocation2] sm:$0xf]
    %v135 = vld [vmem:[#allocation2 + $0x4] sm:$0xf]
    %v136 = vld [vmem:[#allocation2 + $0x8] sm:$0xf]
    %v137 = vld [vmem:[#allocation2 + $0xc] sm:$0xf]
    %v138 = vld [vmem:[#allocation2 + $0x10] sm:$0xf]
    %v139 = vld [vmem:[#allocation2 + $0x14] sm:$0xf]
    %v140 = vld [vmem:[#allocation2 + $0x18] sm:$0xf]
    %v141 = vld [vmem:[#allocation2 + $0x1c] sm:$0xf]
    %v142 = vld [vmem:[#allocation2 + $0x20] sm:$0xf]
    %v143 = vld [vmem:[#allocation2 + $0x24] sm:$0xf]
    %v144 = vld [vmem:[#allocation2 + $0x28] sm:$0xf]
    %v145 = vld [vmem:[#allocation2 + $0x2c] sm:$0xf]
    %v146 = vld [vmem:[#allocation2 + $0x30] sm:$0xf]
    %v147 = vld [vmem:[#allocation2 + $0x34] sm:$0xf]
    %v148 = vld [vmem:[#allocation2 + $0x38] sm:$0xf]
    %v149 = vld [vmem:[#allocation2 + $0x3c] sm:$0xf]
    %v166 = vunpack.c.l.b16 %v134
    %v167 = vunpack.c.l.b16 %v135
    %v168 = vunpack.c.l.b16 %v136
    %v169 = vunpack.c.l.b16 %v137
    %v170 = vunpack.c.l.b16 %v138
    %v171 = vunpack.c.l.b16 %v139
    %v172 = vunpack.c.l.b16 %v140
    %v173 = vunpack.c.l.b16 %v141
    %v174 = vunpack.c.l.b16 %v142
    %v175 = vunpack.c.l.b16 %v143
    %v176 = vunpack.c.l.b16 %v144
    %v177 = vunpack.c.l.b16 %v145
    %v178 = vunpack.c.l.b16 %v146
    %v179 = vunpack.c.l.b16 %v147
    %v180 = vunpack.c.l.b16 %v148
    %v181 = vunpack.c.l.b16 %v149
    %v182 = vpack.c.b16 %v167, %v166
    %v183 = vpack.c.b16 %v169, %v168
    %v184 = vpack.c.b16 %v171, %v170
    %v185 = vpack.c.b16 %v173, %v172
    %v186 = vpack.c.b16 %v175, %v174
    %v187 = vpack.c.b16 %v177, %v176
    %v188 = vpack.c.b16 %v179, %v178
    %v189 = vpack.c.b16 %v181, %v180
    %198 = vmatpush.bf16.msra.mxu0 %v189
    %199 = vmatpush.bf16.msra.mxu0 %v188
    %200 = vmatpush.bf16.msra.mxu0 %v187
    %201 = vmatpush.bf16.msra.mxu0 %v186
    %202 = vmatpush.bf16.msra.mxu0 %v185
    %203 = vmatpush.bf16.msra.mxu0 %v184
    %204 = vmatpush.bf16.msra.mxu0 %v183
    %205 = vmatpush.bf16.msra.mxu0 %v182
    %206 = vmatmul.bf16.gmra.mxu0 %v132
    %v207 = vpop.f32.mrf.mxu0
    %v208 = vadd.f32 0.0, %v207
    %v209 = vpop.f32.mrf.mxu0
    %v210 = vadd.f32 0.0, %v209
    %211 = vmatmul.bf16.gmra.mxu0 %v133
    %v212 = vpop.f32.mrf.mxu0
    %v213 = vadd.f32 0.0, %v212
    %v214 = vpop.f32.mrf.mxu0
    %v215 = vadd.f32 0.0, %v214
    %216 = vdwg.mxu0
    %v217 = vpack.c.bf16 %v210, %v208
    %v218 = vpack.c.bf16 %v215, %v213
    %s219 = scalar_lea.vmem %s4, 2
    %v220 = vld [vmem:[%s219] sm:$0x1]
    %v222 = vperm.slane %v220, 0
    %224 = vmatpush.bf16.msra.mxu0 0
    %225 = vmatpush.bf16.msra.mxu0 0
    %226 = vmatpush.bf16.msra.mxu0 0
    %227 = vmatpush.bf16.msra.mxu0 0
    %228 = vmatpush.bf16.msra.mxu0 0
    %229 = vmatpush.bf16.msra.mxu0 0
    %230 = vmatpush.bf16.msra.mxu0 %v218
    %231 = vmatpush.bf16.msra.mxu0 %v217
    %232 = vmatmul.bf16.gmra.mxu0 %v104
    %v233 = vpop.f32.mrf.mxu0
    %v234 = vadd.f32 %v222, %v233
    %v235 = vpop.f32.mrf.mxu0
    %v236 = vadd.f32 %v222, %v235
    %237 = vmatmul.bf16.gmra.mxu0 %v107
    %v238 = vpop.f32.mrf.mxu0
    %v239 = vadd.f32 %v222, %v238
    %v240 = vpop.f32.mrf.mxu0
    %v241 = vadd.f32 %v222, %v240
    %242 = vdwg.mxu0
    %v243 = vmax.f32 %v234, 0.0
    %v244 = vmax.f32 %v236, 0.0
    %v245 = vmax.f32 %v239, 0.0
    %v246 = vmax.f32 %v241, 0.0
    %v247 = vpack.c.bf16 %v244, %v243
    %v248 = vpack.c.bf16 %v246, %v245
    %s249 = scalar_lea.vmem [#allocation2], 64
    %v250 = vld [vmem:[%s249] sm:$0xf]
    %v251 = vld [vmem:[%s249 + $0x4] sm:$0xf]
    %v252 = vld [vmem:[%s249 + $0x8] sm:$0xf]
    %v253 = vld [vmem:[%s249 + $0xc] sm:$0xf]
    %v254 = vld [vmem:[%s249 + $0x10] sm:$0xf]
    %v255 = vld [vmem:[%s249 + $0x14] sm:$0xf]
    %v256 = vld [vmem:[%s249 + $0x18] sm:$0xf]
    %v257 = vld [vmem:[%s249 + $0x1c] sm:$0xf]
    %v258 = vld [vmem:[%s249 + $0x20] sm:$0xf]
    %v259 = vld [vmem:[%s249 + $0x24] sm:$0xf]
    %v260 = vld [vmem:[%s249 + $0x28] sm:$0xf]
    %v261 = vld [vmem:[%s249 + $0x2c] sm:$0xf]
    %v262 = vld [vmem:[%s249 + $0x30] sm:$0xf]
    %v263 = vld [vmem:[%s249 + $0x34] sm:$0xf]
    %v264 = vld [vmem:[%s249 + $0x38] sm:$0xf]
    %v265 = vld [vmem:[%s249 + $0x3c] sm:$0xf]
    %v282 = vunpack.c.l.b16 %v250
    %v283 = vunpack.c.l.b16 %v251
    %v284 = vunpack.c.l.b16 %v252
    %v285 = vunpack.c.l.b16 %v253
    %v286 = vunpack.c.l.b16 %v254
    %v287 = vunpack.c.l.b16 %v255
    %v288 = vunpack.c.l.b16 %v256
    %v289 = vunpack.c.l.b16 %v257
    %v290 = vunpack.c.l.b16 %v258
    %v291 = vunpack.c.l.b16 %v259
    %v292 = vunpack.c.l.b16 %v260
    %v293 = vunpack.c.l.b16 %v261
    %v294 = vunpack.c.l.b16 %v262
    %v295 = vunpack.c.l.b16 %v263
    %v296 = vunpack.c.l.b16 %v264
    %v297 = vunpack.c.l.b16 %v265
    %v298 = vpack.c.b16 %v283, %v282
    %v299 = vpack.c.b16 %v285, %v284
    %v300 = vpack.c.b16 %v287, %v286
    %v301 = vpack.c.b16 %v289, %v288
    %v302 = vpack.c.b16 %v291, %v290
    %v303 = vpack.c.b16 %v293, %v292
    %v304 = vpack.c.b16 %v295, %v294
    %v305 = vpack.c.b16 %v297, %v296
    %314 = vmatpush.bf16.msra.mxu0 %v305
    %315 = vmatpush.bf16.msra.mxu0 %v304
    %316 = vmatpush.bf16.msra.mxu0 %v303
    %317 = vmatpush.bf16.msra.mxu0 %v302
    %318 = vmatpush.bf16.msra.mxu0 %v301
    %319 = vmatpush.bf16.msra.mxu0 %v300
    %320 = vmatpush.bf16.msra.mxu0 %v299
    %321 = vmatpush.bf16.msra.mxu0 %v298
    %322 = vmatmul.bf16.gmra.mxu0 %v247
    %v323 = vpop.f32.mrf.mxu0
    %v324 = vadd.f32 0.0, %v323
    %v325 = vpop.f32.mrf.mxu0
    %v326 = vadd.f32 0.0, %v325
    %327 = vmatmul.bf16.gmra.mxu0 %v248
    %v328 = vpop.f32.mrf.mxu0
    %v329 = vadd.f32 0.0, %v328
    %v330 = vpop.f32.mrf.mxu0
    %v331 = vadd.f32 0.0, %v330
    %332 = vdwg.mxu0
    %v333 = vpack.c.bf16 %v326, %v324
    %v334 = vpack.c.bf16 %v331, %v329
    %s335 = scalar_lea.vmem %s4, 3
    %v336 = vld [vmem:[%s335] sm:$0x1]
    %v338 = vperm.slane %v336, 0
    %340 = vmatpush.bf16.msra.mxu0 0
    %341 = vmatpush.bf16.msra.mxu0 0
    %342 = vmatpush.bf16.msra.mxu0 0
    %343 = vmatpush.bf16.msra.mxu0 0
    %344 = vmatpush.bf16.msra.mxu0 0
    %345 = vmatpush.bf16.msra.mxu0 0
    %346 = vmatpush.bf16.msra.mxu0 %v334
    %347 = vmatpush.bf16.msra.mxu0 %v333
    %348 = vmatmul.bf16.gmra.mxu0 %v104
    %v349 = vpop.f32.mrf.mxu0
    %v350 = vadd.f32 %v338, %v349
    %v351 = vpop.f32.mrf.mxu0
    %v352 = vadd.f32 %v338, %v351
    %353 = vmatmul.bf16.gmra.mxu0 %v107
    %v354 = vpop.f32.mrf.mxu0
    %v355 = vadd.f32 %v338, %v354
    %v356 = vpop.f32.mrf.mxu0
    %v357 = vadd.f32 %v338, %v356
    %358 = vdwg.mxu0
    %359 = vst [vmem:[%s5] sm:$0xff] %v350
    %360 = vst [vmem:[%s5 + $0x8] sm:$0xff] %v352
    %361 = vst [vmem:[%s5 + $0x10] sm:$0xff] %v355
    %362 = vst [vmem:[%s5 + $0x18] sm:$0xff] %v357
    // Predicated region
    $region26: #{_forward_jit.1} parent=1 // pred_check
      _
    $region27: #{_forward_jit.1} parent=1 // pred_check_branch
      %364 = sbr.rel (0) target = $region29
    $region28: #{_forward_jit.1} parent=1 // pred_region
      _
    $region29: #{_forward_jit.1} parent=1 // pred_fallthru
      _
    // Predicated region
    $region30: #{_forward_jit.1} parent=1 // pred_check
      _
    $region31: #{_forward_jit.1} parent=1 // pred_check_branch
      %366 = sbr.rel (0) target = $region33
    $region32: #{_forward_jit.1} parent=1 // pred_region
      _
    $region33: #{_forward_jit.1} parent=1 // pred_fallthru
      _
    %367 = vsyncpa [#allocation3], 1

</llo_original>
